<compile_context>
chip_gen: v7x
topology: tpu7x:2x2x1
jax: 0.10.0
libtpu: 0.0.40
codegen_flags: <defaults>
</compile_context>

<pallas_src>
import functools

import jax
import jax.numpy as jnp
from jax.experimental import pallas as pl
from jax.experimental.pallas import tpu as pltpu

_HIDDEN = 64
_MAX_TILE = 4096   # max batch-lanes per grid step (multiple of 256)
_MIN_TILE = 256


def _round_up(x, m):
    return ((x + m - 1) // m) * m


def _choose_tile(batch):
    """Batch tile (lane dim).  Single full block for tiny batches; otherwise a
    multiple of 256 sized so there are >= 2 grid steps (v7x: 2 TensorCores),
    capped at _MAX_TILE."""
    if batch <= _MIN_TILE:
        return batch                       # full-extent block: (8,128) rule waived
    tb = _round_up(-(-batch // 2), _MIN_TILE)
    return min(tb, _MAX_TILE)


def _critic_kernel(x_ref, w_ref, b_ref, b3_ref, out_ref, *, in_dim, hidden):
    # x_ref : (in_dim, TB)  bf16   concatenated [state | action | goal], transposed
    # w_ref : (hidden, 128 + hidden) bf16
    #           lanes [0, in_dim)          = W1^T
    #           lanes [128, 128 + hidden)  = W2^T   (128-aligned segment)
    # b_ref : (hidden, 3) f32   columns: b1 | b2 | w3
    # b3_ref: (1, 1) SMEM f32   final bias
    # out_ref: (1, TB) f32      lane-dense q row
    x = x_ref[...]                                   # bf16 (in_dim, TB)
    w1t = w_ref[:, :in_dim]                          # bf16 (hidden, in_dim)
    w2t = w_ref[:, 128:128 + hidden]                 # bf16 (hidden, hidden)

    # Layer 1: Linear + ReLU (bf16 MXU, f32 accumulation, f32 bias/ReLU)
    h1 = jnp.dot(w1t, x, preferred_element_type=jnp.float32)      # (hidden, TB)
    h1 = jnp.maximum(h1 + b_ref[:, 0:1], 0.0)

    # Layer 2: Linear + ReLU
    h2 = jnp.dot(w2t, h1.astype(jnp.bfloat16),
                 preferred_element_type=jnp.float32)               # (hidden, TB)
    h2 = jnp.maximum(h2 + b_ref[:, 1:2], 0.0)

    # Layer 3: Linear(64, 1) as f32 VPU multiply + sublane (XLU) reduction,
    # producing a lane-dense (1, TB) row.
    q = jnp.sum(h2 * b_ref[:, 2:3], axis=0, keepdims=True) + b3_ref[0, 0]

    out_ref[...] = q.astype(out_ref.dtype)


def critic_low_forward(state, action, goal, params):
    """Critic_Low forward: q = MLP(cat([state, action, goal], dim=1)) -> [batch, 1]."""
    w1, b1, w2, b2, w3, b3 = params
    in_dim, hidden = w1.shape
    batch = state.shape[0]

    # Batch-on-lanes activation slab (concat once, transpose in the wrapper).
    xT = jnp.concatenate([state.T, action.T, goal.T], axis=0)      # (in_dim, batch)
    assert xT.shape == (in_dim, batch)
    xT = xT.astype(jnp.bfloat16)

    # Packed bf16 weight block: W1^T at lanes [0, in_dim), W2^T at a
    # 128-aligned lane offset so in-kernel slices stay tile-aligned.
    wpack = jnp.zeros((hidden, 128 + hidden), jnp.bfloat16)
    wpack = wpack.at[:, :in_dim].set(w1.T.astype(jnp.bfloat16))
    wpack = wpack.at[:, 128:128 + hidden].set(w2.T.astype(jnp.bfloat16))

    # f32 small params: columns b1 | b2 | w3 (as columns in the transposed view).
    bpack = jnp.stack([b1.reshape(hidden).astype(jnp.float32),
                       b2.reshape(hidden).astype(jnp.float32),
                       w3.reshape(hidden).astype(jnp.float32)], axis=1)   # (hidden, 3)
    b3_s = jnp.asarray(b3, jnp.float32).reshape(1, 1)

    tb = _choose_tile(batch)
    grid = (pl.cdiv(batch, tb),)

    kernel = functools.partial(_critic_kernel, in_dim=in_dim, hidden=hidden)

    out = pl.pallas_call(
        kernel,
        out_shape=jax.ShapeDtypeStruct((1, batch), jnp.float32),
        grid=grid,
        in_specs=[
            pl.BlockSpec((in_dim, tb), lambda i: (0, i)),            # activations (tiled on lanes)
            pl.BlockSpec((hidden, 128 + hidden), lambda i: (0, 0)),  # packed W1^T / W2^T (resident)
            pl.BlockSpec((hidden, 3), lambda i: (0, 0)),             # packed b1/b2/w3 (resident)
            pl.BlockSpec((1, 1), lambda i: (0, 0),
                         memory_space=pltpu.MemorySpace.SMEM),       # b3 scalar
        ],
        out_specs=pl.BlockSpec((1, tb), lambda i: (0, i)),           # lane-dense q row
        compiler_params=pltpu.CompilerParams(
            dimension_semantics=("parallel",)),
    )(xT, wpack, bpack, b3_s)

    # (1, batch) -> (batch, 1) to match the module contract.
    return out.reshape(batch, 1)


def init_params(key, state_dim, action_dim, goal_dim, hidden=_HIDDEN):
    """Deterministic init mimicking PyTorch Linear default (U[-1/sqrt(fan_in), +])."""
    in_dim = state_dim + action_dim + goal_dim
    ks = jax.random.split(key, 6)

    def lin(kw, kb, fan_in, fan_out):
        bound = 1.0 / jnp.sqrt(float(fan_in))
        # store W as [fan_in, fan_out] (so reference does x @ W)
        w = jax.random.uniform(kw, (fan_in, fan_out), jnp.float32, -bound, bound)
        b = jax.random.uniform(kb, (1, fan_out), jnp.float32, -bound, bound)
        return w, b

    w1, b1 = lin(ks[0], ks[1], in_dim, hidden)
    w2, b2 = lin(ks[2], ks[3], hidden, hidden)
    w3, b3 = lin(ks[4], ks[5], hidden, 1)
    return (w1, b1, w2, b2, w3, b3)


def reference_forward(state, action, goal, params):
    """Plain-JAX f32 reference, identical math to the PyTorch module."""
    w1, b1, w2, b2, w3, b3 = params
    x = jnp.concatenate([state, action, goal], axis=1)
    h1 = jnp.maximum(x @ w1 + b1, 0.0)
    h2 = jnp.maximum(h1 @ w2 + b2, 0.0)
    return h2 @ w3 + b3


if __name__ == "__main__":
    key = jax.random.PRNGKey(0)

    # Small shapes consistent with the module (bioreactor-like dims).
    batch, state_dim, action_dim, goal_dim = 8, 6, 3, 2

    k_s, k_a, k_g, k_p = jax.random.split(key, 4)
    state = jax.random.normal(k_s, (batch, state_dim), jnp.float32)
    action = jax.random.normal(k_a, (batch, action_dim), jnp.float32)
    goal = jax.random.normal(k_g, (batch, goal_dim), jnp.float32)

    params = init_params(k_p, state_dim, action_dim, goal_dim)

    q = jax.block_until_ready(critic_low_forward(state, action, goal, params))
    q_ref = reference_forward(state, action, goal, params)

    assert q.shape == (batch, 1)
    # Tolerance accounts for bf16 MXU inputs (f32 accumulation).
    assert jnp.allclose(q, q_ref, atol=5e-2, rtol=5e-2), "mismatch vs reference"

    print("KERNEL_OK")
</pallas_src>

<mosaic_0001>
module attributes {stable_mosaic.version = 11 : i64} {
  func.func @_critic_kernel(%arg0: i32, %arg1: memref<11x8xbf16, #tpu.memory_space<vmem>>, %arg2: memref<64x192xbf16, #tpu.memory_space<vmem>>, %arg3: memref<64x3xf32, #tpu.memory_space<vmem>>, %arg4: memref<1x1xf32, #tpu.memory_space<smem>>, %arg5: memref<1x8xf32, #tpu.memory_space<vmem>>) attributes {dimension_semantics = [#tpu.dimension_semantics<parallel>], iteration_bounds = array<i64: 1>, scalar_prefetch = 0 : i64, scratch_operands = 0 : i64, tpu.core_type = #tpu.core_type<tc>, window_params = [{transform_indices = @transform_0, window_bounds = array<i64: 11, 8>}, {pipeline_mode = #tpu.pipeline_mode<synchronous>, transform_indices = @transform_1, window_bounds = array<i64: 64, 192>}, {pipeline_mode = #tpu.pipeline_mode<synchronous>, transform_indices = @transform_2, window_bounds = array<i64: 64, 3>}, {transform_indices = @transform_3, window_bounds = array<i64: 1, 1>}, {transform_indices = @transform_4, window_bounds = array<i64: 1, 8>}]} {
    %c0 = arith.constant 0 : index
    %c0_0 = arith.constant 0 : index
    %0 = vector.load %arg1[%c0, %c0_0] : memref<11x8xbf16, #tpu.memory_space<vmem>>, vector<11x8xbf16>
    %c0_1 = arith.constant 0 : index
    %c0_2 = arith.constant 0 : index
    %1 = vector.load %arg2[%c0_1, %c0_2] : memref<64x192xbf16, #tpu.memory_space<vmem>>, vector<64x11xbf16>
    %c0_3 = arith.constant 0 : index
    %c128 = arith.constant 128 : index
    %2 = vector.load %arg2[%c0_3, %c128] : memref<64x192xbf16, #tpu.memory_space<vmem>>, vector<64x64xbf16>
    %cst = arith.constant dense<0.000000e+00> : vector<64x8xf32>
    %3 = tpu.matmul %1, %0, %cst {dimension_numbers = #tpu.dot_dimension_numbers<[1], [0], [0], [1], [0, 0, 1, 1], [], []>} : vector<64x11xbf16>, vector<11x8xbf16>, vector<64x8xf32> -> vector<64x8xf32>
    %c0_4 = arith.constant 0 : index
    %c0_5 = arith.constant 0 : index
    %4 = vector.load %arg3[%c0_4, %c0_5] : memref<64x3xf32, #tpu.memory_space<vmem>>, vector<64x1xf32>
    %5 = vector.broadcast %4 : vector<64x1xf32> to vector<64x8xf32>
    %6 = arith.addf %3, %5 : vector<64x8xf32>
    %cst_6 = arith.constant 0.000000e+00 : f32
    %7 = vector.broadcast %cst_6 : f32 to vector<64x8xf32>
    %8 = arith.maximumf %6, %7 : vector<64x8xf32>
    %9 = arith.truncf %8 : vector<64x8xf32> to vector<64x8xbf16>
    %cst_7 = arith.constant dense<0.000000e+00> : vector<64x8xf32>
    %10 = tpu.matmul %2, %9, %cst_7 {dimension_numbers = #tpu.dot_dimension_numbers<[1], [0], [0], [1], [0, 0, 1, 1], [], []>} : vector<64x64xbf16>, vector<64x8xbf16>, vector<64x8xf32> -> vector<64x8xf32>
    %c0_8 = arith.constant 0 : index
    %c1 = arith.constant 1 : index
    %11 = vector.load %arg3[%c0_8, %c1] : memref<64x3xf32, #tpu.memory_space<vmem>>, vector<64x1xf32>
    %12 = vector.broadcast %11 : vector<64x1xf32> to vector<64x8xf32>
    %13 = arith.addf %10, %12 : vector<64x8xf32>
    %cst_9 = arith.constant 0.000000e+00 : f32
    %14 = vector.broadcast %cst_9 : f32 to vector<64x8xf32>
    %15 = arith.maximumf %13, %14 : vector<64x8xf32>
    %c0_10 = arith.constant 0 : index
    %c2 = arith.constant 2 : index
    %16 = vector.load %arg3[%c0_10, %c2] : memref<64x3xf32, #tpu.memory_space<vmem>>, vector<64x1xf32>
    %17 = vector.broadcast %16 : vector<64x1xf32> to vector<64x8xf32>
    %18 = arith.mulf %15, %17 : vector<64x8xf32>
    %cst_11 = arith.constant dense<0.000000e+00> : vector<8xf32>
    %19 = vector.multi_reduction <add>, %18, %cst_11 [0] : vector<64x8xf32> to vector<8xf32>
    %20 = vector.shape_cast %19 : vector<8xf32> to vector<1x8xf32>
    %c0_12 = arith.constant 0 : index
    %c0_13 = arith.constant 0 : index
    %21 = memref.load %arg4[%c0_12, %c0_13] : memref<1x1xf32, #tpu.memory_space<smem>>
    %22 = vector.broadcast %21 : f32 to vector<1x8xf32>
    %23 = arith.addf %20, %22 : vector<1x8xf32>
    %c0_14 = arith.constant 0 : index
    %c0_15 = arith.constant 0 : index
    %24 = vector.load %arg5[%c0_14, %c0_15] : memref<1x8xf32, #tpu.memory_space<vmem>>, vector<1x8xf32>
    tpu.vector_store %arg5[%c0_14, %c0_15], %23 {strides = array<i32>} : memref<1x8xf32, #tpu.memory_space<vmem>>, vector<1x8xf32>,
    return
  }
  func.func @transform_0(%arg0: i32) -> (i32, i32) {
    %c0_i32 = arith.constant 0 : i32
    %c0_i32_0 = arith.constant 0 : i32
    return %c0_i32, %arg0 : i32, i32
  }
  func.func @transform_1(%arg0: i32) -> (i32, i32) {
    %c0_i32 = arith.constant 0 : i32
    %c0_i32_0 = arith.constant 0 : i32
    %c0_i32_1 = arith.constant 0 : i32
    return %c0_i32, %c0_i32_0 : i32, i32
  }
  func.func @transform_2(%arg0: i32) -> (i32, i32) {
    %c0_i32 = arith.constant 0 : i32
    %c0_i32_0 = arith.constant 0 : i32
    %c0_i32_1 = arith.constant 0 : i32
    return %c0_i32, %c0_i32_0 : i32, i32
  }
  func.func @transform_3(%arg0: i32) -> (i32, i32) {
    %c0_i32 = arith.constant 0 : i32
    %c0_i32_0 = arith.constant 0 : i32
    %c0_i32_1 = arith.constant 0 : i32
    return %c0_i32, %c0_i32_0 : i32, i32
  }
  func.func @transform_4(%arg0: i32) -> (i32, i32) {
    %c0_i32 = arith.constant 0 : i32
    %c0_i32_0 = arith.constant 0 : i32
    return %c0_i32, %arg0 : i32, i32
  }
}

</mosaic_0001>

<llo_original>
// kernel: tpu_custom_call.1
$region0: #{tpu_custom_call.1}
  #allocation0 [shape = 'u32[]', space=smem, size = 0x4, offset = 0x4, fixed_abs, tag = 'smem constant byte address 0x4 - core index']
  #allocation1 [shape = 'u32[144,128]{1,0:T(1,128)}', space=vmem, size = 0x12000, scoped, tag = 'internal scratch']
  #allocation2 [shape = 'f32[1,1]{1,0:T(1,128)S(6)}', space=smem, size = 0x200, scoped, tag = 'scoped memory for tpu_custom_call.1']
  %s0 = inlined_call_operand.vmem [shape: bf16[11,8], index: 0, kind: input, shape index: {}]
  %s1 = inlined_call_operand.vmem [shape: bf16[64,192], index: 1, kind: input, shape index: {}]
  %s2 = inlined_call_operand.vmem [shape: f32[64,3], index: 2, kind: input, shape index: {}]
  %s3 = inlined_call_operand.<no memory space> [shape: f32[1,1], index: 3, kind: input, shape index: {}]
  %s4 = inlined_call_operand.hbm [shape: f32[1,8], index: 4, kind: output, shape index: {}]
  %s5 = sld [smem:[#allocation0]]
  $region26: #{tpu_custom_call.1} parent=0
    _
  %s7 = ssub.s32 1, %s5
  %s8 = scalar_select 0, %s7, %s5
  %9 = sst [smem:[#allocation2]] %s3
  $region1: #{tpu_custom_call.1} parent=0
    #allocation3 [shape = 'u8[512]{0}', space=vmem, size = 0x400, scoped, tag = 'output window, operand 0, single buffered']
    #allocation4 [shape = 's32[1]{0}', space=sflag, size = 0x4, scoped, tag = 'scoped memory for tpu_custom_call.1']
    %10 = vsyncpa [#allocation4], 0
    // Predicated region
    $region2: #{tpu_custom_call.1} parent=1 // pred_check
      _
    $region3: #{tpu_custom_call.1} parent=1 // pred_check_branch
      %12 = sbr.rel (0) target = $region5
    $region4: #{tpu_custom_call.1} parent=1 // pred_region
      _
    $region5: #{tpu_custom_call.1} parent=1 // pred_fallthru
      _
    // Predicated region
    $region6: #{tpu_custom_call.1} parent=1 // pred_check
      _
    $region7: #{tpu_custom_call.1} parent=1 // pred_check_branch
      %14 = sbr.rel (0) target = $region9
    $region8: #{tpu_custom_call.1} parent=1 // pred_region
      _
    $region9: #{tpu_custom_call.1} parent=1 // pred_fallthru
      _
    // Predicated region
    $region10: #{tpu_custom_call.1} parent=1 // pred_check
      _
    $region11: #{tpu_custom_call.1} parent=1 // pred_check_branch
      %16 = sbr.rel (0) target = $region13
    $region12: #{tpu_custom_call.1} parent=1 // pred_region
      _
    $region13: #{tpu_custom_call.1} parent=1 // pred_fallthru
      _
    // Predicated region
    $region14: #{tpu_custom_call.1} parent=1 // pred_check
      _
    $region15: #{tpu_custom_call.1} parent=1 // pred_check_branch
      %18 = sbr.rel (0) target = $region17
    $region16: #{tpu_custom_call.1} parent=1 // pred_region
      _
    $region17: #{tpu_custom_call.1} parent=1 // pred_fallthru
      _
    %v20 = vld [vmem:[%s0] sm:$0xf]
    %v21 = vld [vmem:[%s0 + $0x4] sm:$0x3]
    %v22 = vld [vmem:[%s1] sm:$0xf]
    %v23 = vld [vmem:[%s1 + $0x8] sm:$0xf]
    %v24 = vld [vmem:[%s1 + $0x10] sm:$0xf]
    %v25 = vld [vmem:[%s1 + $0x18] sm:$0xf]
    %v26 = vld [vmem:[%s1 + $0x20] sm:$0xf]
    %v27 = vld [vmem:[%s1 + $0x28] sm:$0xf]
    %v28 = vld [vmem:[%s1 + $0x30] sm:$0xf]
    %v29 = vld [vmem:[%s1 + $0x38] sm:$0xf]
    %v30 = vld [vmem:[%s1 + $0x4] sm:$0xf]
    %v31 = vld [vmem:[%s1 + $0xc] sm:$0xf]
    %v32 = vld [vmem:[%s1 + $0x14] sm:$0xf]
    %v33 = vld [vmem:[%s1 + $0x1c] sm:$0xf]
    %v34 = vld [vmem:[%s1 + $0x24] sm:$0xf]
    %v35 = vld [vmem:[%s1 + $0x2c] sm:$0xf]
    %v36 = vld [vmem:[%s1 + $0x34] sm:$0xf]
    %v37 = vld [vmem:[%s1 + $0x3c] sm:$0xf]
    %v38 = vld [vmem:[%s2] sm:$0xff]
    %v39 = vld [vmem:[%s2 + $0x8] sm:$0xff]
    %v40 = vld [vmem:[%s2 + $0x10] sm:$0xff]
    %v41 = vld [vmem:[%s2 + $0x18] sm:$0xff]
    %v42 = vld [vmem:[%s2 + $0x20] sm:$0xff]
    %v43 = vld [vmem:[%s2 + $0x28] sm:$0xff]
    %v44 = vld [vmem:[%s2 + $0x30] sm:$0xff]
    %v45 = vld [vmem:[%s2 + $0x38] sm:$0xff]
    %47 = vset.pattern.permute.xlu0 0
    %48 = vperm.xlu0 %47, %v38
    %v49 = vpop.permute.xlu0 %48
    %52 = vset.pattern.permute.xlu0 0
    %53 = vperm.xlu0 %52, %v39
    %v54 = vpop.permute.xlu0 %53
    %57 = vset.pattern.permute.xlu0 0
    %58 = vperm.xlu0 %57, %v40
    %v59 = vpop.permute.xlu0 %58
    %62 = vset.pattern.permute.xlu0 0
    %63 = vperm.xlu0 %62, %v41
    %v64 = vpop.permute.xlu0 %63
    %67 = vset.pattern.permute.xlu0 0
    %68 = vperm.xlu0 %67, %v42
    %v69 = vpop.permute.xlu0 %68
    %72 = vset.pattern.permute.xlu0 0
    %73 = vperm.xlu0 %72, %v43
    %v74 = vpop.permute.xlu0 %73
    %77 = vset.pattern.permute.xlu0 0
    %78 = vperm.xlu0 %77, %v44
    %v79 = vpop.permute.xlu0 %78
    %82 = vset.pattern.permute.xlu0 0
    %83 = vperm.xlu0 %82, %v45
    %v84 = vpop.permute.xlu0 %83
    %v94 = vunpack.c.l.b16 %v22
    %v95 = vunpack.c.l.b16 %v23
    %v96 = vunpack.c.l.b16 %v24
    %v97 = vunpack.c.l.b16 %v25
    %v98 = vunpack.c.l.b16 %v26
    %v99 = vunpack.c.l.b16 %v27
    %v100 = vunpack.c.l.b16 %v28
    %v101 = vunpack.c.l.b16 %v29
    %v102 = vpack.c.b16 %v95, %v94
    %v103 = vpack.c.b16 %v97, %v96
    %v104 = vpack.c.b16 %v99, %v98
    %v105 = vpack.c.b16 %v101, %v100
    %v108 = vunpack.c.l.b16 %v20
    %v109 = vunpack.c.l.b16 %v21
    %v110 = vpack.c.b16 %v109, %v108
    %vm111 = vcmask 89088
    %v113 = vsel %vm111, %v102, 0
    %v116 = vsel %vm111, %v103, 0
    %v119 = vsel %vm111, %v104, 0
    %v122 = vsel %vm111, %v105, 0
    %vm124 = vcmask 1044480
    %vm125 = vcmask 1045504
    %v126 = vsel %vm124, 4294967295, 65535
    %v127 = vsel %vm125, %v126, 0
    %v129 = vand.u32 %v110, %v127
    %131 = vmatprep.subr.bf16.mxu0 0
    %132 = vmatpush1.bf16.msra.mxu0 %v129
    %133 = vmatprep.subr.bf16.mxu0 0
    %134 = vmatpush1.bf16.msra.mxu0 0
    %135 = vmatprep.subr.bf16.mxu0 0
    %136 = vmatpush1.bf16.msra.mxu0 0
    %137 = vmatprep.subr.bf16.mxu0 0
    %138 = vmatpush1.bf16.msra.mxu0 0
    %139 = vmatprep.subr.bf16.mxu0 0
    %140 = vmatpush1.bf16.msra.mxu0 0
    %141 = vmatprep.subr.bf16.mxu0 0
    %142 = vmatpush1.bf16.msra.mxu0 0
    %143 = vmatprep.subr.bf16.mxu0 0
    %144 = vmatpush1.bf16.msra.mxu0 0
    %145 = vmatprep.subr.bf16.mxu0 0
    %146 = vmatpush1.bf16.msra.mxu0 0
    %147 = vmatprep.subr.bf16.mxu0 0
    %148 = vmatpush1.bf16.msra.mxu0 0
    %149 = vmatprep.subr.bf16.mxu0 0
    %150 = vmatpush1.bf16.msra.mxu0 0
    %151 = vmatprep.subr.bf16.mxu0 0
    %152 = vmatpush1.bf16.msra.mxu0 0
    %153 = vmatprep.subr.bf16.mxu0 0
    %154 = vmatpush1.bf16.msra.mxu0 0
    %155 = vmatprep.subr.bf16.mxu0 0
    %156 = vmatpush1.bf16.msra.mxu0 0
    %157 = vmatprep.subr.bf16.mxu0 0
    %158 = vmatpush1.bf16.msra.mxu0 0
    %159 = vmatprep.subr.bf16.mxu0 0
    %160 = vmatpush1.bf16.msra.mxu0 0
    %161 = vmatprep.subr.bf16.mxu0 0
    %162 = vmatpush1.bf16.msra.mxu0 0
    %163 = vmatprep.mubr.bf16.mxu0 0
    %164 = vmatmul.mubr.bf16.gmra.mrb[0].mxu0 %v113
    %v165 = vpop.f32.mrb[0].mxu0
    %v166 = vadd.f32 %v49, %v165
    %v167 = vpop.f32.mrb[0].mxu0
    %v168 = vpop.f32.mrb[0].mxu0
    %v169 = vadd.f32 %v54, %v168
    %v170 = vpop.f32.mrb[0].mxu0
    %171 = vmatprep.mubr.bf16.mxu0 0
    %172 = vmatmul.mubr.bf16.gmra.mrb[0].mxu0 %v116
    %v173 = vpop.f32.mrb[0].mxu0
    %v174 = vadd.f32 %v59, %v173
    %v175 = vpop.f32.mrb[0].mxu0
    %v176 = vpop.f32.mrb[0].mxu0
    %v177 = vadd.f32 %v64, %v176
    %v178 = vpop.f32.mrb[0].mxu0
    %179 = vmatprep.mubr.bf16.mxu0 0
    %180 = vmatmul.mubr.bf16.gmra.mrb[0].mxu0 %v119
    %v181 = vpop.f32.mrb[0].mxu0
    %v182 = vadd.f32 %v69, %v181
    %v183 = vpop.f32.mrb[0].mxu0
    %v184 = vpop.f32.mrb[0].mxu0
    %v185 = vadd.f32 %v74, %v184
    %v186 = vpop.f32.mrb[0].mxu0
    %187 = vmatprep.mubr.bf16.mxu0 0
    %188 = vmatmul.mubr.bf16.gmra.mrb[0].mxu0 %v122
    %v189 = vpop.f32.mrb[0].mxu0
    %v190 = vadd.f32 %v79, %v189
    %v191 = vpop.f32.mrb[0].mxu0
    %v192 = vpop.f32.mrb[0].mxu0
    %v193 = vadd.f32 %v84, %v192
    %v194 = vpop.f32.mrb[0].mxu0
    %195 = vdwg.mxu0
    %v196 = vmax.f32 %v166, 0.0
    %v197 = vmax.f32 %v169, 0.0
    %v198 = vmax.f32 %v174, 0.0
    %v199 = vmax.f32 %v177, 0.0
    %v200 = vmax.f32 %v182, 0.0
    %v201 = vmax.f32 %v185, 0.0
    %v202 = vmax.f32 %v190, 0.0
    %v203 = vmax.f32 %v193, 0.0
    %v204 = vpack.c.bf16 %v197, %v196
    %v205 = vpack.c.bf16 %v199, %v198
    %v206 = vpack.c.bf16 %v201, %v200
    %v207 = vpack.c.bf16 %v203, %v202
    %208 = vset.pattern.permute.xlu0 1
    %209 = vperm.xlu0 %208, %v38
    %v210 = vpop.permute.xlu0 %209
    %212 = vset.pattern.permute.xlu0 1
    %213 = vperm.xlu0 %212, %v39
    %v214 = vpop.permute.xlu0 %213
    %216 = vset.pattern.permute.xlu0 1
    %217 = vperm.xlu0 %216, %v40
    %v218 = vpop.permute.xlu0 %217
    %220 = vset.pattern.permute.xlu0 1
    %221 = vperm.xlu0 %220, %v41
    %v222 = vpop.permute.xlu0 %221
    %224 = vset.pattern.permute.xlu0 1
    %225 = vperm.xlu0 %224, %v42
    %v226 = vpop.permute.xlu0 %225
    %228 = vset.pattern.permute.xlu0 1
    %229 = vperm.xlu0 %228, %v43
    %v230 = vpop.permute.xlu0 %229
    %232 = vset.pattern.permute.xlu0 1
    %233 = vperm.xlu0 %232, %v44
    %v234 = vpop.permute.xlu0 %233
    %236 = vset.pattern.permute.xlu0 1
    %237 = vperm.xlu0 %236, %v45
    %v238 = vpop.permute.xlu0 %237
    %v248 = vunpack.c.l.b16 %v30
    %v249 = vunpack.c.l.b16 %v31
    %v250 = vunpack.c.l.b16 %v32
    %v251 = vunpack.c.l.b16 %v33
    %v252 = vunpack.c.l.b16 %v34
    %v253 = vunpack.c.l.b16 %v35
    %v254 = vunpack.c.l.b16 %v36
    %v255 = vunpack.c.l.b16 %v37
    %v256 = vpack.c.b16 %v249, %v248
    %v257 = vpack.c.b16 %v251, %v250
    %v258 = vpack.c.b16 %v253, %v252
    %v259 = vpack.c.b16 %v255, %v254
    %vm260 = vcmask 523264
    %v262 = vsel %vm260, %v256, 0
    %v265 = vsel %vm260, %v257, 0
    %v268 = vsel %vm260, %v258, 0
    %v271 = vsel %vm260, %v259, 0
    %273 = vmatprep.subr.bf16.mxu0 0
    %274 = vmatpush1.bf16.msra.mxu0 %v204
    %275 = vmatprep.subr.bf16.mxu0 0
    %276 = vmatpush1.bf16.msra.mxu0 %v205
    %277 = vmatprep.subr.bf16.mxu0 0
    %278 = vmatpush1.bf16.msra.mxu0 %v206
    %279 = vmatprep.subr.bf16.mxu0 0
    %280 = vmatpush1.bf16.msra.mxu0 %v207
    %281 = vmatprep.subr.bf16.mxu0 0
    %282 = vmatpush1.bf16.msra.mxu0 0
    %283 = vmatprep.subr.bf16.mxu0 0
    %284 = vmatpush1.bf16.msra.mxu0 0
    %285 = vmatprep.subr.bf16.mxu0 0
    %286 = vmatpush1.bf16.msra.mxu0 0
    %287 = vmatprep.subr.bf16.mxu0 0
    %288 = vmatpush1.bf16.msra.mxu0 0
    %289 = vmatprep.subr.bf16.mxu0 0
    %290 = vmatpush1.bf16.msra.mxu0 0
    %291 = vmatprep.subr.bf16.mxu0 0
    %292 = vmatpush1.bf16.msra.mxu0 0
    %293 = vmatprep.subr.bf16.mxu0 0
    %294 = vmatpush1.bf16.msra.mxu0 0
    %295 = vmatprep.subr.bf16.mxu0 0
    %296 = vmatpush1.bf16.msra.mxu0 0
    %297 = vmatprep.subr.bf16.mxu0 0
    %298 = vmatpush1.bf16.msra.mxu0 0
    %299 = vmatprep.subr.bf16.mxu0 0
    %300 = vmatpush1.bf16.msra.mxu0 0
    %301 = vmatprep.subr.bf16.mxu0 0
    %302 = vmatpush1.bf16.msra.mxu0 0
    %303 = vmatprep.subr.bf16.mxu0 0
    %304 = vmatpush1.bf16.msra.mxu0 0
    %305 = vmatprep.mubr.bf16.mxu0 0
    %306 = vmatmul.mubr.bf16.gmra.mrb[0].mxu0 %v262
    %v307 = vpop.f32.mrb[0].mxu0
    %v308 = vadd.f32 %v210, %v307
    %v309 = vpop.f32.mrb[0].mxu0
    %v310 = vpop.f32.mrb[0].mxu0
    %v311 = vadd.f32 %v214, %v310
    %v312 = vpop.f32.mrb[0].mxu0
    %313 = vmatprep.mubr.bf16.mxu0 0
    %314 = vmatmul.mubr.bf16.gmra.mrb[0].mxu0 %v265
    %v315 = vpop.f32.mrb[0].mxu0
    %v316 = vadd.f32 %v218, %v315
    %v317 = vpop.f32.mrb[0].mxu0
    %v318 = vpop.f32.mrb[0].mxu0
    %v319 = vadd.f32 %v222, %v318
    %v320 = vpop.f32.mrb[0].mxu0
    %321 = vmatprep.mubr.bf16.mxu0 0
    %322 = vmatmul.mubr.bf16.gmra.mrb[0].mxu0 %v268
    %v323 = vpop.f32.mrb[0].mxu0
    %v324 = vadd.f32 %v226, %v323
    %v325 = vpop.f32.mrb[0].mxu0
    %v326 = vpop.f32.mrb[0].mxu0
    %v327 = vadd.f32 %v230, %v326
    %v328 = vpop.f32.mrb[0].mxu0
    %329 = vmatprep.mubr.bf16.mxu0 0
    %330 = vmatmul.mubr.bf16.gmra.mrb[0].mxu0 %v271
    %v331 = vpop.f32.mrb[0].mxu0
    %v332 = vadd.f32 %v234, %v331
    %v333 = vpop.f32.mrb[0].mxu0
    %v334 = vpop.f32.mrb[0].mxu0
    %v335 = vadd.f32 %v238, %v334
    %v336 = vpop.f32.mrb[0].mxu0
    %337 = vdwg.mxu0
    %v338 = vmax.f32 %v308, 0.0
    %v339 = vmax.f32 %v311, 0.0
    %v340 = vmax.f32 %v316, 0.0
    %v341 = vmax.f32 %v319, 0.0
    %v342 = vmax.f32 %v324, 0.0
    %v343 = vmax.f32 %v327, 0.0
    %v344 = vmax.f32 %v332, 0.0
    %v345 = vmax.f32 %v335, 0.0
    %346 = vset.pattern.permute.xlu0 2
    %347 = vperm.xlu0 %346, %v38
    %v348 = vpop.permute.xlu0 %347
    %350 = vset.pattern.permute.xlu0 2
    %351 = vperm.xlu0 %350, %v39
    %v352 = vpop.permute.xlu0 %351
    %354 = vset.pattern.permute.xlu0 2
    %355 = vperm.xlu0 %354, %v40
    %v356 = vpop.permute.xlu0 %355
    %358 = vset.pattern.permute.xlu0 2
    %359 = vperm.xlu0 %358, %v41
    %v360 = vpop.permute.xlu0 %359
    %362 = vset.pattern.permute.xlu0 2
    %363 = vperm.xlu0 %362, %v42
    %v364 = vpop.permute.xlu0 %363
    %366 = vset.pattern.permute.xlu0 2
    %367 = vperm.xlu0 %366, %v43
    %v368 = vpop.permute.xlu0 %367
    %370 = vset.pattern.permute.xlu0 2
    %371 = vperm.xlu0 %370, %v44
    %v372 = vpop.permute.xlu0 %371
    %374 = vset.pattern.permute.xlu0 2
    %375 = vperm.xlu0 %374, %v45
    %v376 = vpop.permute.xlu0 %375
    %v378 = vmul.f32 %v338, %v348
    %v379 = vmul.f32 %v339, %v352
    %v380 = vmul.f32 %v340, %v356
    %v381 = vmul.f32 %v341, %v360
    %v382 = vmul.f32 %v342, %v364
    %v383 = vmul.f32 %v343, %v368
    %v384 = vmul.f32 %v344, %v372
    %v385 = vmul.f32 %v345, %v376
    %vm386 = vcmask 64512
    %v387 = vsel %vm386, %v378, 0.0
    %v388 = vsel %vm386, %v379, 0.0
    %v389 = vadd.f32 %v387, %v388
    %v390 = vsel %vm386, %v380, 0.0
    %v391 = vadd.f32 %v389, %v390
    %v392 = vsel %vm386, %v381, 0.0
    %v393 = vadd.f32 %v391, %v392
    %v394 = vsel %vm386, %v382, 0.0
    %v395 = vadd.f32 %v393, %v394
    %v396 = vsel %vm386, %v383, 0.0
    %v397 = vadd.f32 %v395, %v396
    %v398 = vsel %vm386, %v384, 0.0
    %v399 = vadd.f32 %v397, %v398
    %v400 = vsel %vm386, %v385, 0.0
    %v401 = vadd.f32 %v399, %v400
    %v402 = vrot.slane %v401, 4
    %v403 = vadd.f32 %v401, %v402
    %v404 = vrot.slane %v403, 2
    %v405 = vadd.f32 %v403, %v404
    %v406 = vrot.slane %v405, 1
    %v407 = vadd.f32 %v405, %v406
    %s408 = sld [smem:[#allocation2]]
    %v409 = vstv %s408
    %v410 = vadd.f32 %v407, %v409
    %vm411 = vcmask 57344
    %412 = vst.msk [vmem:[#allocation3] sm:$0x1] %vm411, %v410
    // Predicated region
    $region18: #{tpu_custom_call.1} parent=1 // pred_check
      _
    $region19: #{tpu_custom_call.1} parent=1 // pred_check_branch
      %414 = sbr.rel (0) target = $region21
    $region20: #{tpu_custom_call.1} parent=1 // pred_region
      %s416 = ssub.s32 16, 16
      %417 = vsyncadd [#allocation4], %s416
      %s419 = sshll.u32 [#allocation3], 4
      %s420 = int_to_ptr.vmem [resolvable:$true] %s419
      %422 = dma.vmem_to_hbm [thread:$0]  %s420, 16, %s4, [#allocation4]
    $region21: #{tpu_custom_call.1} parent=1 // pred_fallthru
      _
    // Predicated region
    $region22: #{tpu_custom_call.1} parent=1 // pred_check
      _
    $region23: #{tpu_custom_call.1} parent=1 // pred_check_branch
      %424 = sbr.rel (0) target = $region25
    $region24: #{tpu_custom_call.1} parent=1 // pred_region
      %425 = dma.done [#allocation4], 16
    $region25: #{tpu_custom_call.1} parent=1 // pred_fallthru
      _
    %426 = vsyncpa [#allocation4], 1

</llo_original>
